<compile_context>
chip_gen: v7x
topology: tpu7x:2x2x1
jax: 0.10.0
libtpu: 0.0.40
codegen_flags: <defaults>
</compile_context>

<pallas_src>
import functools

import jax
import jax.numpy as jnp
from jax import lax
from jax.experimental import pallas as pl
from jax.experimental.pallas import tpu as pltpu

_MIB = 1 << 20


def _vmem_capacity_bytes():
    """Generation-aware VMEM capacity (v5e/v6e: 128 MiB, v7x: 64 MiB per core)."""
    try:
        info = pltpu.get_tpu_info()
        cap = int(getattr(info, "vmem_capacity_bytes", 0) or 0)
        if cap > 0:
            return cap
    except Exception:
        pass
    return 64 * _MIB  # conservative fallback (v7x per-core VMEM)


def _round_down_128(v):
    return max(128, (int(v) // 128) * 128)


# --------------------------------------------------------------------------------------
# Fused single-pass kernel: pool + MLP + scale, one HBM read + one HBM write.
# --------------------------------------------------------------------------------------
def _fused_kernel(x_ref, w1t_ref, b1_ref, w2_ref, b2_ref, o_ref, *, inv_hw):
    x = x_ref[0]                                                           # (C, HW) native
    # Global average pool: f32 accumulation, no whole-tile upcast held live.
    mean = jnp.sum(x, axis=-1, keepdims=True, dtype=jnp.float32) * inv_hw  # (C, 1) f32

    # Tiny MLP, transpose-free: broadcast-multiply + reductions (VPU/XLU, no 1-lane MXU op).
    w1t = w1t_ref[...].astype(jnp.float32)                                 # (C, Cm)
    hid = jnp.sum(w1t * mean, axis=0, keepdims=True)                       # (1, Cm)
    hid = jnp.maximum(hid + b1_ref[...].astype(jnp.float32), 0.0)
    w2 = w2_ref[...].astype(jnp.float32)                                   # (C, Cm)
    att = jnp.sum(w2 * hid, axis=-1, keepdims=True)                        # (C, 1)
    att = jax.nn.sigmoid(att + b2_ref[...].astype(jnp.float32))

    # Per-channel rescale in the input dtype, broadcast over the lane (spatial) axis.
    o_ref[0] = (x * att.astype(x.dtype)).astype(o_ref.dtype)


# --------------------------------------------------------------------------------------
# Two-phase kernels (large images).
# --------------------------------------------------------------------------------------
def _pool_kernel(x_ref, sum_ref, *, tiles_per_split, tile, hw, needs_mask):
    """Accumulate per-channel spatial sums in f32 across HW tiles (reduction axis last)."""
    s = pl.program_id(0)
    t = pl.program_id(2)

    @pl.when(t == 0)
    def _():
        sum_ref[...] = jnp.zeros_like(sum_ref)

    xb = x_ref[0]                                                          # (C, tile)
    if needs_mask:
        # Mask the ragged last tile (and any clamped duplicate tile from the core split)
        # instead of padding x in HBM: zero lanes whose global offset is >= HW.
        lane = lax.broadcasted_iota(jnp.int32, xb.shape, 1)
        start = (s * tiles_per_split + t) * tile
        xb = jnp.where(start + lane < hw, xb, jnp.zeros_like(xb))
    sum_ref[0, 0] += jnp.sum(xb, axis=-1, keepdims=True, dtype=jnp.float32)


def _scale_kernel(x_ref, att_ref, o_ref):
    """o = x * att; att (C, 1) broadcast over lanes, native dtype. Edge-block OOB lanes
    are dropped by Pallas on write, so no mask is needed here."""
    o_ref[0] = (x_ref[0] * att_ref[0]).astype(o_ref.dtype)


# --------------------------------------------------------------------------------------
# Wrapper
# --------------------------------------------------------------------------------------
def ca_layer(x, w1, b1, w2, b2, *, hw_tile_target=None, donate_x=False, force_path=None):
    """Channel attention (CALayer).

    x:  (N, C, H, W) NCHW
    w1: (C_mid, C), b1: (C_mid, 1)   -- first 1x1 conv (squeezed)
    w2: (C, C_mid), b2: (C, 1)       -- second 1x1 conv (squeezed)
    force_path: None | "fused" | "two_phase" (testing / override)
    """
    N, C, H, W = x.shape
    C_mid = w1.shape[0]
    HW = H * W
    itemsize = jnp.dtype(x.dtype).itemsize
    x_flat = x.reshape(N, C, HW)                     # metadata-only reshape

    vmem_cap = _vmem_capacity_bytes()

    # --- path selection: fused when the double-buffered per-sample slab fits VMEM -----
    slab_bytes = C * HW * itemsize
    fused_need = 4 * slab_bytes + 2 * _MIB           # 2x in + 2x out buffers + weights/etc.
    use_fused = fused_need <= int(0.70 * vmem_cap)
    if force_path == "fused":
        use_fused = True
    elif force_path == "two_phase":
        use_fused = False
    if HW < 128:                                     # two-phase tiling needs >= one 128-lane tile
        use_fused = True

    alias = {"input_output_aliases": {0: 0}} if donate_x else {}

    if use_fused:
        # ---- single pass: read x once, write out once --------------------------------
        w1t = jnp.transpose(jnp.reshape(w1, (C_mid, C)))       # (C, C_mid)
        b1r = jnp.reshape(b1, (1, C_mid))
        b2c = jnp.reshape(b2, (C, 1))
        vmem_limit = int(min(0.75 * vmem_cap, max(32 * _MIB, fused_need + 4 * _MIB)))

        out_flat = pl.pallas_call(
            functools.partial(_fused_kernel, inv_hw=1.0 / HW),
            out_shape=jax.ShapeDtypeStruct((N, C, HW), x.dtype),
            grid_spec=pltpu.PrefetchScalarGridSpec(
                num_scalar_prefetch=0,
                grid=(N,),
                in_specs=[
                    pl.BlockSpec((1, C, HW), lambda n: (n, 0, 0)),
                    pl.BlockSpec((C, C_mid), lambda n: (0, 0)),
                    pl.BlockSpec((1, C_mid), lambda n: (0, 0)),
                    pl.BlockSpec((C, C_mid), lambda n: (0, 0)),
                    pl.BlockSpec((C, 1), lambda n: (0, 0)),
                ],
                out_specs=pl.BlockSpec((1, C, HW), lambda n: (n, 0, 0)),
            ),
            compiler_params=pltpu.CompilerParams(
                dimension_semantics=("parallel",),
                vmem_limit_bytes=vmem_limit),
            **alias,
        )(x_flat, w1t, b1r, w2, b2c)
        return out_flat.reshape(N, C, H, W)

    # ---- two-phase path (large images) ------------------------------------------------
    # Tile selection: generation-aware target (~cap/16 per block), always a multiple of 128,
    # never bigger than the 128-aligned spatial extent, bounded so ~6 double-buffered blocks
    # stay comfortably inside VMEM on any generation.
    if hw_tile_target is not None:
        tile = _round_down_128(hw_tile_target)
    else:
        target_block_bytes = max(_MIB, vmem_cap // 16)          # ~4 MiB v7x, ~8 MiB v5e/v6e
        tile = _round_down_128(target_block_bytes // (C * itemsize))
    tile = min(tile, _round_down_128(HW))
    tile = min(tile, _round_down_128(int(0.10 * vmem_cap) // max(1, C * itemsize)))

    total_tiles = pl.cdiv(HW, tile)
    block_bytes = C * tile * itemsize
    vmem_limit = int(min(0.75 * vmem_cap, max(32 * _MIB, 6 * block_bytes + 4 * _MIB)))

    # v7x megacore: when N == 1 the only parallel axis has extent 1, so split the HW tiles
    # across a leading parallel axis of 2 and emit per-split partial sums (added below).
    # Harmless on single-core chips (same total tile count, one extra tiny output row).
    n_split = 2 if (N == 1 and total_tiles >= 2) else 1
    tiles_per_split = pl.cdiv(total_tiles, n_split)
    needs_mask = (HW % tile != 0) or (n_split * tiles_per_split != total_tiles)

    def x_pool_map(s, n, t):
        # Clamp possible overrun tiles of the last split; their contribution is fully
        # masked out inside the kernel (global offset >= HW).
        return (n, 0, jnp.minimum(s * tiles_per_split + t, total_tiles - 1))

    partial_sums = pl.pallas_call(
        functools.partial(_pool_kernel, tiles_per_split=tiles_per_split,
                          tile=tile, hw=HW, needs_mask=needs_mask),
        out_shape=jax.ShapeDtypeStruct((n_split, N, C, 1), jnp.float32),
        grid_spec=pltpu.PrefetchScalarGridSpec(
            num_scalar_prefetch=0,
            grid=(n_split, N, tiles_per_split),
            in_specs=[pl.BlockSpec((1, C, tile), x_pool_map)],
            out_specs=pl.BlockSpec((1, 1, C, 1), lambda s, n, t: (s, n, 0, 0)),
        ),
        compiler_params=pltpu.CompilerParams(
            dimension_semantics=("parallel", "parallel", "arbitrary"),
            vmem_limit_bytes=vmem_limit),
    )(x_flat)

    # Tiny per-sample MLP in plain JAX: negligible next to streaming a large image
    # (the fused path above handles the latency-sensitive small-feature-map case).
    f32 = jnp.float32
    pooled = jnp.sum(partial_sums, axis=0)[:, :, 0] * (1.0 / HW)            # (N, C) f32
    hid = jnp.maximum(pooled @ w1.T.astype(f32) + b1[:, 0].astype(f32), 0.0)
    att = jax.nn.sigmoid(hid @ w2.T.astype(f32) + b2[:, 0].astype(f32))     # (N, C)
    att = att.astype(x.dtype)[:, :, None]                                    # (N, C, 1)

    out_flat = pl.pallas_call(
        _scale_kernel,
        out_shape=jax.ShapeDtypeStruct((N, C, HW), x.dtype),
        grid_spec=pltpu.PrefetchScalarGridSpec(
            num_scalar_prefetch=0,
            grid=(N, total_tiles),
            in_specs=[pl.BlockSpec((1, C, tile), lambda n, t: (n, 0, t)),
                      pl.BlockSpec((1, C, 1), lambda n, t: (n, 0, 0))],
            out_specs=pl.BlockSpec((1, C, tile), lambda n, t: (n, 0, t)),
        ),
        compiler_params=pltpu.CompilerParams(
            dimension_semantics=("parallel", "parallel"),
            vmem_limit_bytes=vmem_limit),
        **alias,
    )(x_flat, att)

    return out_flat.reshape(N, C, H, W)


# --------------------------------------------------------------------------------------
# Reference + tests
# --------------------------------------------------------------------------------------
def ca_layer_ref(x, w1, b1, w2, b2):
    f32 = jnp.float32
    pooled = jnp.mean(x.astype(f32), axis=(2, 3))                            # (N, C)
    hid = jnp.maximum(pooled @ w1.T.astype(f32) + b1[:, 0].astype(f32), 0.0)
    att = jax.nn.sigmoid(hid @ w2.T.astype(f32) + b2[:, 0].astype(f32))
    return x * att.astype(x.dtype)[:, :, None, None]


def _make_params(key, C, reduction, dtype):
    C_mid = C // reduction
    k1, k2, k3, k4 = jax.random.split(key, 4)
    w1 = (jax.random.normal(k1, (C_mid, C), dtype=jnp.float32) * 0.1).astype(dtype)
    b1 = (jax.random.normal(k2, (C_mid, 1), dtype=jnp.float32) * 0.1).astype(dtype)
    w2 = (jax.random.normal(k3, (C, C_mid), dtype=jnp.float32) * 0.1).astype(dtype)
    b2 = (jax.random.normal(k4, (C, 1), dtype=jnp.float32) * 0.1).astype(dtype)
    return w1, b1, w2, b2


def _check(out, ref, tol):
    assert out.shape == ref.shape and out.dtype == ref.dtype
    assert jnp.allclose(out.astype(jnp.float32), ref.astype(jnp.float32),
                        atol=tol, rtol=tol)


if __name__ == "__main__":
    key = jax.random.PRNGKey(0)

    # --- test 1: fused single-pass path, f32, N=2, C=64 (reduction=16) ---------------
    kx, kp, key = jax.random.split(key, 3)
    N, C, H, W = 2, 64, 16, 16
    x = jax.random.normal(kx, (N, C, H, W), dtype=jnp.float32)
    w1, b1, w2, b2 = _make_params(kp, C, 16, jnp.float32)
    out = jax.block_until_ready(ca_layer(x, w1, b1, w2, b2))
    _check(out, ca_layer_ref(x, w1, b1, w2, b2), 1e-5)

    # --- test 2: fused path, bf16, N=1 ------------------------------------------------
    kx, kp, key = jax.random.split(key, 3)
    N, C, H, W = 1, 64, 32, 32
    x = jax.random.normal(kx, (N, C, H, W), dtype=jnp.float32).astype(jnp.bfloat16)
    w1, b1, w2, b2 = _make_params(kp, C, 16, jnp.bfloat16)
    out = jax.block_until_ready(ca_layer(x, w1, b1, w2, b2))
    _check(out, ca_layer_ref(x, w1, b1, w2, b2), 2e-2)

    # --- test 3: forced two-phase path, N=2 (no core split), aligned HW ---------------
    kx, kp, key = jax.random.split(key, 3)
    N, C, H, W = 2, 64, 16, 16
    x = jax.random.normal(kx, (N, C, H, W), dtype=jnp.float32)
    w1, b1, w2, b2 = _make_params(kp, C, 16, jnp.float32)
    out = jax.block_until_ready(
        ca_layer(x, w1, b1, w2, b2, hw_tile_target=128, force_path="two_phase"))
    _check(out, ca_layer_ref(x, w1, b1, w2, b2), 1e-5)

    # --- test 4: forced two-phase, N=1 (core split), ragged last tile (HW=144) --------
    kx, kp, key = jax.random.split(key, 3)
    N, C, H, W = 1, 32, 12, 12
    x = jax.random.normal(kx, (N, C, H, W), dtype=jnp.float32)
    w1, b1, w2, b2 = _make_params(kp, C, 8, jnp.float32)
    out = jax.block_until_ready(
        ca_layer(x, w1, b1, w2, b2, hw_tile_target=128, force_path="two_phase"))
    _check(out, ca_layer_ref(x, w1, b1, w2, b2), 1e-5)

    # --- test 5: forced two-phase, N=1, odd tile count (split clamp + masked dup) -----
    kx, kp, key = jax.random.split(key, 3)
    N, C, H, W = 1, 32, 18, 18   # HW=324 -> 3 tiles of 128, split 2 x 2 with 1 duplicate
    x = jax.random.normal(kx, (N, C, H, W), dtype=jnp.float32)
    w1, b1, w2, b2 = _make_params(kp, C, 8, jnp.float32)
    out = jax.block_until_ready(
        ca_layer(x, w1, b1, w2, b2, hw_tile_target=128, force_path="two_phase"))
    _check(out, ca_layer_ref(x, w1, b1, w2, b2), 1e-5)

    print("KERNEL_OK")
</pallas_src>

<mosaic_0001>
module attributes {stable_mosaic.version = 11 : i64} {
  func.func @_fused_kernel(%arg0: i32, %arg1: memref<1x64x256xf32, #tpu.memory_space<vmem>>, %arg2: memref<64x4xf32, #tpu.memory_space<vmem>>, %arg3: memref<1x4xf32, #tpu.memory_space<vmem>>, %arg4: memref<64x4xf32, #tpu.memory_space<vmem>>, %arg5: memref<64x1xf32, #tpu.memory_space<vmem>>, %arg6: memref<1x64x256xf32, #tpu.memory_space<vmem>>) attributes {dimension_semantics = [#tpu.dimension_semantics<parallel>], iteration_bounds = array<i64: 2>, scalar_prefetch = 0 : i64, scratch_operands = 0 : i64, tpu.core_type = #tpu.core_type<tc>, window_params = [{transform_indices = @transform_0, window_bounds = array<i64: 1, 64, 256>}, {pipeline_mode = #tpu.pipeline_mode<synchronous>, transform_indices = @transform_1, window_bounds = array<i64: 64, 4>}, {pipeline_mode = #tpu.pipeline_mode<synchronous>, transform_indices = @transform_2, window_bounds = array<i64: 1, 4>}, {pipeline_mode = #tpu.pipeline_mode<synchronous>, transform_indices = @transform_3, window_bounds = array<i64: 64, 4>}, {pipeline_mode = #tpu.pipeline_mode<synchronous>, transform_indices = @transform_4, window_bounds = array<i64: 64, 1>}, {transform_indices = @transform_5, window_bounds = array<i64: 1, 64, 256>}]} {
    %c0 = arith.constant 0 : index
    %c0_0 = arith.constant 0 : index
    %c0_1 = arith.constant 0 : index
    %0 = vector.load %arg1[%c0, %c0_0, %c0_1] : memref<1x64x256xf32, #tpu.memory_space<vmem>>, vector<1x64x256xf32>
    %1 = vector.shape_cast %0 : vector<1x64x256xf32> to vector<64x256xf32>
    %cst = arith.constant dense<0.000000e+00> : vector<64xf32>
    %2 = vector.multi_reduction <add>, %1, %cst [1] : vector<64x256xf32> to vector<64xf32>
    %3 = vector.shape_cast %2 : vector<64xf32> to vector<64x1xf32>
    %cst_2 = arith.constant 3.906250e-03 : f32
    %4 = vector.broadcast %cst_2 : f32 to vector<64x1xf32>
    %5 = arith.mulf %3, %4 : vector<64x1xf32>
    %c0_3 = arith.constant 0 : index
    %c0_4 = arith.constant 0 : index
    %6 = vector.load %arg2[%c0_3, %c0_4] : memref<64x4xf32, #tpu.memory_space<vmem>>, vector<64x4xf32>
    %7 = vector.broadcast %5 : vector<64x1xf32> to vector<64x4xf32>
    %8 = arith.mulf %6, %7 : vector<64x4xf32>
    %cst_5 = arith.constant dense<0.000000e+00> : vector<4xf32>
    %9 = vector.multi_reduction <add>, %8, %cst_5 [0] : vector<64x4xf32> to vector<4xf32>
    %10 = vector.shape_cast %9 : vector<4xf32> to vector<1x4xf32>
    %c0_6 = arith.constant 0 : index
    %c0_7 = arith.constant 0 : index
    %11 = vector.load %arg3[%c0_6, %c0_7] : memref<1x4xf32, #tpu.memory_space<vmem>>, vector<1x4xf32>
    %12 = arith.addf %10, %11 : vector<1x4xf32>
    %cst_8 = arith.constant 0.000000e+00 : f32
    %13 = vector.broadcast %cst_8 : f32 to vector<1x4xf32>
    %14 = arith.maximumf %12, %13 : vector<1x4xf32>
    %c0_9 = arith.constant 0 : index
    %c0_10 = arith.constant 0 : index
    %15 = vector.load %arg4[%c0_9, %c0_10] : memref<64x4xf32, #tpu.memory_space<vmem>>, vector<64x4xf32>
    %16 = vector.broadcast %14 : vector<1x4xf32> to vector<64x4xf32>
    %17 = arith.mulf %15, %16 : vector<64x4xf32>
    %cst_11 = arith.constant dense<0.000000e+00> : vector<64xf32>
    %18 = vector.multi_reduction <add>, %17, %cst_11 [1] : vector<64x4xf32> to vector<64xf32>
    %19 = vector.shape_cast %18 : vector<64xf32> to vector<64x1xf32>
    %c0_12 = arith.constant 0 : index
    %c0_13 = arith.constant 0 : index
    %20 = vector.load %arg5[%c0_12, %c0_13] : memref<64x1xf32, #tpu.memory_space<vmem>>, vector<64x1xf32>
    %21 = arith.addf %19, %20 : vector<64x1xf32>
    %22 = arith.negf %21 : vector<64x1xf32>
    %23 = math.exp %22 : vector<64x1xf32>
    %cst_14 = arith.constant 1.000000e+00 : f32
    %24 = vector.broadcast %cst_14 : f32 to vector<64x1xf32>
    %25 = arith.addf %24, %23 : vector<64x1xf32>
    %26 = arith.divf %24, %25 : vector<64x1xf32>
    %27 = vector.broadcast %26 : vector<64x1xf32> to vector<64x256xf32>
    %28 = arith.mulf %1, %27 : vector<64x256xf32>
    %c0_15 = arith.constant 0 : index
    %c0_16 = arith.constant 0 : index
    %c0_17 = arith.constant 0 : index
    %29 = vector.load %arg6[%c0_15, %c0_16, %c0_17] : memref<1x64x256xf32, #tpu.memory_space<vmem>>, vector<1x64x256xf32>
    %30 = vector.shape_cast %29 : vector<1x64x256xf32> to vector<64x256xf32>
    %31 = vector.shape_cast %28 : vector<64x256xf32> to vector<1x64x256xf32>
    tpu.vector_store %arg6[%c0_15, %c0_16, %c0_17], %31 {strides = array<i32>} : memref<1x64x256xf32, #tpu.memory_space<vmem>>, vector<1x64x256xf32>,
    return
  }
  func.func @transform_0(%arg0: i32) -> (i32, i32, i32) {
    %c0_i32 = arith.constant 0 : i32
    %c0_i32_0 = arith.constant 0 : i32
    %c0_i32_1 = arith.constant 0 : i32
    return %arg0, %c0_i32, %c0_i32_0 : i32, i32, i32
  }
  func.func @transform_1(%arg0: i32) -> (i32, i32) {
    %c0_i32 = arith.constant 0 : i32
    %c0_i32_0 = arith.constant 0 : i32
    %c0_i32_1 = arith.constant 0 : i32
    return %c0_i32, %c0_i32_0 : i32, i32
  }
  func.func @transform_2(%arg0: i32) -> (i32, i32) {
    %c0_i32 = arith.constant 0 : i32
    %c0_i32_0 = arith.constant 0 : i32
    %c0_i32_1 = arith.constant 0 : i32
    return %c0_i32, %c0_i32_0 : i32, i32
  }
  func.func @transform_3(%arg0: i32) -> (i32, i32) {
    %c0_i32 = arith.constant 0 : i32
    %c0_i32_0 = arith.constant 0 : i32
    %c0_i32_1 = arith.constant 0 : i32
    return %c0_i32, %c0_i32_0 : i32, i32
  }
  func.func @transform_4(%arg0: i32) -> (i32, i32) {
    %c0_i32 = arith.constant 0 : i32
    %c0_i32_0 = arith.constant 0 : i32
    %c0_i32_1 = arith.constant 0 : i32
    return %c0_i32, %c0_i32_0 : i32, i32
  }
  func.func @transform_5(%arg0: i32) -> (i32, i32, i32) {
    %c0_i32 = arith.constant 0 : i32
    %c0_i32_0 = arith.constant 0 : i32
    %c0_i32_1 = arith.constant 0 : i32
    return %arg0, %c0_i32, %c0_i32_0 : i32, i32, i32
  }
}

</mosaic_0001>

<llo_original>
// kernel: tpu_custom_call.1
$region0: #{tpu_custom_call.1}
  #allocation0 [shape = 'u32[]', space=smem, size = 0x4, offset = 0x4, fixed_abs, tag = 'smem constant byte address 0x4 - core index']
  #allocation1 [shape = 'u32[144,128]{1,0:T(1,128)}', space=vmem, size = 0x12000, scoped, tag = 'internal scratch']
  %s0 = inlined_call_operand.hbm [shape: f32[2,64,256], index: 0, kind: input, shape index: {}]
  %s1 = inlined_call_operand.vmem [shape: f32[64,4], index: 1, kind: input, shape index: {}]
  %s2 = inlined_call_operand.vmem [shape: f32[1,4], index: 2, kind: input, shape index: {}]
  %s3 = inlined_call_operand.vmem [shape: f32[64,4], index: 3, kind: input, shape index: {}]
  %s4 = inlined_call_operand.vmem [shape: f32[64,1], index: 4, kind: input, shape index: {}]
  %s5 = inlined_call_operand.hbm [shape: f32[2,64,256], index: 5, kind: output, shape index: {}]
  %s6 = sld [smem:[#allocation0]]
  $region57: #{tpu_custom_call.1} parent=0
    _
  %s8 = ssub.s32 1, %s6
  %s9 = scalar_select 0, %s8, %s6
  $region1: #{tpu_custom_call.1} parent=0
    #allocation2 [shape = 'u8[131072]{0}', space=vmem, size = 0x20000, scoped, tag = 'input window, operand 0']
    #allocation3 [shape = 's32[2]{0}', space=sflag, size = 0x8, scoped, tag = 'scoped memory for tpu_custom_call.1']
    #allocation4 [shape = 's32[2]{0}', space=sflag, size = 0x8, scoped, tag = 'scoped memory for tpu_custom_call.1']
    #allocation5 [shape = 'u8[131072]{0}', space=vmem, size = 0x20000, scoped, tag = 'output window, operand 0']
    %10 = vsyncpa [#allocation3], 0
    %s11 = scalar_lea.sflag [#allocation3], 1
    %12 = vsyncpa %s11, 0
    %13 = vsyncpa [#allocation4], 0
    %s14 = scalar_lea.sflag [#allocation4], 1
    %15 = vsyncpa %s14, 0
    loop: start=0, step=1, limit=4
    $region2: #{tpu_custom_call.1} parent=1 // loop_pre_header
      _
    $region3: #{tpu_custom_call.1} parent=1 // loop_header
      %s17 = sphi 0, %s21
      %p18 = scmp.ge.s32.totalorder %s17, 4
      %s27 = sphi 0, %s29
      %s30 = sphi 0, %s27
      %s31 = sphi 0, %s30
      %s47 = sphi 0, %s31
      %s51 = sphi 0, %s51
      %s53 = sphi 0, %s51
      %s54 = sphi 0, %s53
      %s68 = sphi 0, %s54
      %s72 = sphi 0, %s72
      %s74 = sphi 0, %s72
      %s75 = sphi 0, %s74
      %s89 = sphi 0, %s75
      %s93 = sphi 0, %s93
      %s95 = sphi 0, %s93
      %s96 = sphi 0, %s95
      %s110 = sphi 0, %s96
      %s114 = sphi 0, %s114
      %s116 = sphi 0, %s114
      %s117 = sphi 0, %s116
      %s131 = sphi 0, %s117
      %s137 = sphi 0, %s139
      %s140 = sphi 0, %s137
      %s141 = sphi 0, %s140
      %s157 = sphi 0, %s141
    $region4: #{tpu_custom_call.1} parent=1 // loop_header_branch
      %20 = sbr.rel (%p18) target = $region8
    $region5: #{tpu_custom_call.1} parent=1 // loop_body
      %s22 = ssub.s32 %s17, 1
      %s23 = ssub.s32 %s17, 2
      %s24 = sadd.s32 %s17, 1
      %s25 = ssub.s32 %s17, %s24
      %p26 = scmp.eq.s32.totalorder %s25, 0
      %s28 = sadd.s32 %s27, 1
      %s29 = scalar_select %p26, %s27, %s28
      %p32 = pneg %p26
      %p33 = scmp.eq.s32.totalorder %s17, 1
      %p34 = por %p32, %p33
      %p35 = scmp.ne.s32.totalorder %s27, %s30
      %p36 = scmp.eq.s32.totalorder %s17, 0
      %p37 = por %p35, %p36
      %p38 = scmp.ne.s32.totalorder %s27, %s30
      %p39 = scmp.eq.s32.totalorder %s22, 1
      %p40 = por %p38, %p39
      %p41 = scmp.ne.s32.totalorder %s30, %s31
      %p42 = scmp.eq.s32.totalorder %s22, 0
      %p43 = por %p41, %p42
      %p44 = scmp.ne.s32.totalorder %s30, %s31
      %p45 = scmp.eq.s32.totalorder %s23, 1
      %p46 = por %p44, %p45
      %p48 = scmp.ne.s32.totalorder %s31, %s47
      %p49 = scmp.eq.s32.totalorder %s23, 0
      %p50 = por %p48, %p49
      %s52 = sadd.s32 %s51, 1
      %p55 = scmp.eq.s32.totalorder %s17, 1
      %p56 = scmp.ne.s32.totalorder %s51, %s53
      %p57 = scmp.eq.s32.totalorder %s17, 0
      %p58 = por %p56, %p57
      %p59 = scmp.ne.s32.totalorder %s51, %s53
      %p60 = scmp.eq.s32.totalorder %s22, 1
      %p61 = por %p59, %p60
      %p62 = scmp.ne.s32.totalorder %s53, %s54
      %p63 = scmp.eq.s32.totalorder %s22, 0
      %p64 = por %p62, %p63
      %p65 = scmp.ne.s32.totalorder %s53, %s54
      %p66 = scmp.eq.s32.totalorder %s23, 1
      %p67 = por %p65, %p66
      %p69 = scmp.ne.s32.totalorder %s54, %s68
      %p70 = scmp.eq.s32.totalorder %s23, 0
      %p71 = por %p69, %p70
      %s73 = sadd.s32 %s72, 1
      %p76 = scmp.eq.s32.totalorder %s17, 1
      %p77 = scmp.ne.s32.totalorder %s72, %s74
      %p78 = scmp.eq.s32.totalorder %s17, 0
      %p79 = por %p77, %p78
      %p80 = scmp.ne.s32.totalorder %s72, %s74
      %p81 = scmp.eq.s32.totalorder %s22, 1
      %p82 = por %p80, %p81
      %p83 = scmp.ne.s32.totalorder %s74, %s75
      %p84 = scmp.eq.s32.totalorder %s22, 0
      %p85 = por %p83, %p84
      %p86 = scmp.ne.s32.totalorder %s74, %s75
      %p87 = scmp.eq.s32.totalorder %s23, 1
      %p88 = por %p86, %p87
      %p90 = scmp.ne.s32.totalorder %s75, %s89
      %p91 = scmp.eq.s32.totalorder %s23, 0
      %p92 = por %p90, %p91
      %s94 = sadd.s32 %s93, 1
      %p97 = scmp.eq.s32.totalorder %s17, 1
      %p98 = scmp.ne.s32.totalorder %s93, %s95
      %p99 = scmp.eq.s32.totalorder %s17, 0
      %p100 = por %p98, %p99
      %p101 = scmp.ne.s32.totalorder %s93, %s95
      %p102 = scmp.eq.s32.totalorder %s22, 1
      %p103 = por %p101, %p102
      %p104 = scmp.ne.s32.totalorder %s95, %s96
      %p105 = scmp.eq.s32.totalorder %s22, 0
      %p106 = por %p104, %p105
      %p107 = scmp.ne.s32.totalorder %s95, %s96
      %p108 = scmp.eq.s32.totalorder %s23, 1
      %p109 = por %p107, %p108
      %p111 = scmp.ne.s32.totalorder %s96, %s110
      %p112 = scmp.eq.s32.totalorder %s23, 0
      %p113 = por %p111, %p112
      %s115 = sadd.s32 %s114, 1
      %p118 = scmp.eq.s32.totalorder %s17, 1
      %p119 = scmp.ne.s32.totalorder %s114, %s116
      %p120 = scmp.eq.s32.totalorder %s17, 0
      %p121 = por %p119, %p120
      %p122 = scmp.ne.s32.totalorder %s114, %s116
      %p123 = scmp.eq.s32.totalorder %s22, 1
      %p124 = por %p122, %p123
      %p125 = scmp.ne.s32.totalorder %s116, %s117
      %p126 = scmp.eq.s32.totalorder %s22, 0
      %p127 = por %p125, %p126
      %p128 = scmp.ne.s32.totalorder %s116, %s117
      %p129 = scmp.eq.s32.totalorder %s23, 1
      %p130 = por %p128, %p129
      %p132 = scmp.ne.s32.totalorder %s117, %s131
      %p133 = scmp.eq.s32.totalorder %s23, 0
      %p134 = por %p132, %p133
      %s135 = ssub.s32 %s17, %s24
      %p136 = scmp.eq.s32.totalorder %s135, 0
      %s138 = sadd.s32 %s137, 1
      %s139 = scalar_select %p136, %s137, %s138
      %p142 = pneg %p136
      %p143 = scmp.eq.s32.totalorder %s17, 1
      %p144 = por %p142, %p143
      %p145 = scmp.ne.s32.totalorder %s137, %s140
      %p146 = scmp.eq.s32.totalorder %s17, 0
      %p147 = por %p145, %p146
      %p148 = scmp.ne.s32.totalorder %s137, %s140
      %p149 = scmp.eq.s32.totalorder %s22, 1
      %p150 = por %p148, %p149
      %p151 = scmp.ne.s32.totalorder %s140, %s141
      %p152 = scmp.eq.s32.totalorder %s22, 0
      %p153 = por %p151, %p152
      %p154 = scmp.ne.s32.totalorder %s140, %s141
      %p155 = scmp.eq.s32.totalorder %s23, 1
      %p156 = por %p154, %p155
      %p158 = scmp.ne.s32.totalorder %s141, %s157
      %p159 = scmp.eq.s32.totalorder %s23, 0
      %p160 = por %p158, %p159
      %p161 = scmp.le.s32.totalorder 1, %s17
      %p162 = scmp.lt.s32.totalorder %s17, 3
      %p163 = pnand %p161, %p162
      %p164 = pneg %p163
      // Predicated region
      $region9: #{tpu_custom_call.1} parent=5 // pred_check
        _
      $region10: #{tpu_custom_call.1} parent=5 // pred_check_branch
        %166 = sbr.rel (%p163) target = $region12
      $region11: #{tpu_custom_call.1} parent=5 // pred_region
        %s167 = ssub.s32 %s17, 1
        // Predicated region
        $region13: #{tpu_custom_call.1} parent=11 // pred_check
          %p168 = pneg %p64
        $region14: #{tpu_custom_call.1} parent=11 // pred_check_branch
          %170 = sbr.rel (%p168) target = $region16
        $region15: #{tpu_custom_call.1} parent=11 // pred_region
          _
        $region16: #{tpu_custom_call.1} parent=11 // pred_fallthru
          _
        // Predicated region
        $region17: #{tpu_custom_call.1} parent=11 // pred_check
          %p171 = pneg %p85
        $region18: #{tpu_custom_call.1} parent=11 // pred_check_branch
          %173 = sbr.rel (%p171) target = $region20
        $region19: #{tpu_custom_call.1} parent=11 // pred_region
          _
        $region20: #{tpu_custom_call.1} parent=11 // pred_fallthru
          _
        // Predicated region
        $region21: #{tpu_custom_call.1} parent=11 // pred_check
          %p174 = pneg %p106
        $region22: #{tpu_custom_call.1} parent=11 // pred_check_branch
          %176 = sbr.rel (%p174) target = $region24
        $region23: #{tpu_custom_call.1} parent=11 // pred_region
          _
        $region24: #{tpu_custom_call.1} parent=11 // pred_fallthru
          _
        // Predicated region
        $region25: #{tpu_custom_call.1} parent=11 // pred_check
          %p177 = pneg %p127
        $region26: #{tpu_custom_call.1} parent=11 // pred_check_branch
          %179 = sbr.rel (%p177) target = $region28
        $region27: #{tpu_custom_call.1} parent=11 // pred_region
          _
        $region28: #{tpu_custom_call.1} parent=11 // pred_fallthru
          _
      $region12: #{tpu_custom_call.1} parent=5 // pred_fallthru
        _
      %p180 = scmp.lt.s32.totalorder %s17, 2
      // Predicated region
      $region29: #{tpu_custom_call.1} parent=5 // pred_check
        %p181 = pneg %p180
      $region30: #{tpu_custom_call.1} parent=5 // pred_check_branch
        %183 = sbr.rel (%p181) target = $region32
      $region31: #{tpu_custom_call.1} parent=5 // pred_region
        // Predicated region
        $region33: #{tpu_custom_call.1} parent=31 // pred_check
          %p184 = pneg %p37
        $region34: #{tpu_custom_call.1} parent=31 // pred_check_branch
          %186 = sbr.rel (%p184) target = $region36
        $region35: #{tpu_custom_call.1} parent=31 // pred_region
          %s187 = sand.u32 %s27, 1
          %s188 = scalar_lea.sflag [#allocation3], %s187
          %s189 = sand.u32 %s27, 1
          %s190 = smul.addr %s189, 128
          %s191 = scalar_lea.vmem [#allocation2], %s190
          %s193 = ssub.s32 2048, 2048
          %194 = vsyncadd %s188, %s193
          %s195 = smul.addr %s17, 16
          %s196 = smul.addr %s195, 128
          %s197 = scalar_lea.hbm %s0, %s196
          %s198 = sshll.u32 %s191, 4
          %s199 = int_to_ptr.vmem [resolvable:$true] %s198
          %204 = dma.hbm_to_vmem [thread:$0]  %s197, 2048, %s199, %s188, 256, 256, 16
        $region36: #{tpu_custom_call.1} parent=31 // pred_fallthru
          _
      $region32: #{tpu_custom_call.1} parent=5 // pred_fallthru
        _
      %p205 = scmp.le.s32.totalorder 1, %s17
      %p206 = scmp.lt.s32.totalorder %s17, 3
      %p207 = pnand %p205, %p206
      %p208 = pneg %p207
      // Predicated region
      $region37: #{tpu_custom_call.1} parent=5 // pred_check
        _
      $region38: #{tpu_custom_call.1} parent=5 // pred_check_branch
        %210 = sbr.rel (%p207) target = $region40
      $region39: #{tpu_custom_call.1} parent=5 // pred_region
        %s211 = ssub.s32 %s17, 1
        %s212 = sand.u32 %s30, 1
        %s213 = scalar_lea.sflag [#allocation3], %s212
        %s214 = sand.u32 %s30, 1
        %s215 = smul.addr %s214, 128
        %s216 = scalar_lea.vmem [#allocation2], %s215
        // Predicated region
        $region41: #{tpu_custom_call.1} parent=39 // pred_check
          %p217 = pneg %p43
        $region42: #{tpu_custom_call.1} parent=39 // pred_check_branch
          %219 = sbr.rel (%p217) target = $region44
        $region43: #{tpu_custom_call.1} parent=39 // pred_region
          %220 = dma.done %s213, 2048
        $region44: #{tpu_custom_call.1} parent=39 // pred_fallthru
          _
        %s221 = sand.u32 %s30, 1
        %s222 = scalar_lea.sflag [#allocation3], %s221
        %s223 = sand.u32 %s30, 1
        %s224 = smul.addr %s223, 128
        %s225 = scalar_lea.vmem [#allocation2], %s224
        %p226 = pneg %p43
        %p227 = pneg %p40
        %p228 = pneg %p64
        %p229 = pneg %p61
        %p230 = pneg %p85
        %p231 = pneg %p82
        %p232 = pneg %p106
        %p233 = pneg %p103
        %p234 = pneg %p127
        %p235 = pneg %p124
        %p236 = pneg %p153
        %p237 = pneg %p150
        %s238 = sand.u32 %s140, 1
        %s239 = scalar_lea.sflag [#allocation4], %s238
        %s240 = sand.u32 %s140, 1
        %s241 = smul.addr %s240, 128
        %s242 = scalar_lea.vmem [#allocation5], %s241
        %v243 = vld [vmem:[%s216] sm:$0xff]
        %v244 = vld [vmem:[%s216 + $0x8] sm:$0xff]
        %v245 = vld [vmem:[%s216 + $0x10] sm:$0xff]
        %v246 = vld [vmem:[%s216 + $0x18] sm:$0xff]
        %v247 = vld [vmem:[%s216 + $0x20] sm:$0xff]
        %v248 = vld [vmem:[%s216 + $0x28] sm:$0xff]
        %v249 = vld [vmem:[%s216 + $0x30] sm:$0xff]
        %v250 = vld [vmem:[%s216 + $0x38] sm:$0xff]
        %v251 = vld [vmem:[%s216 + $0x40] sm:$0xff]
        %v252 = vld [vmem:[%s216 + $0x48] sm:$0xff]
        %v253 = vld [vmem:[%s216 + $0x50] sm:$0xff]
        %v254 = vld [vmem:[%s216 + $0x58] sm:$0xff]
        %v255 = vld [vmem:[%s216 + $0x60] sm:$0xff]
        %v256 = vld [vmem:[%s216 + $0x68] sm:$0xff]
        %v257 = vld [vmem:[%s216 + $0x70] sm:$0xff]
        %v258 = vld [vmem:[%s216 + $0x78] sm:$0xff]
        %v259 = vadd.f32 %v243, %v244
        %260 = vadd.xlane.f32.xlu0 %v259
        %v261 = vpop.xlane.xlu0 %260
        %v262 = vadd.f32 %v245, %v246
        %263 = vadd.xlane.f32.xlu0 %v262
        %v264 = vpop.xlane.xlu0 %263
        %v265 = vadd.f32 %v247, %v248
        %266 = vadd.xlane.f32.xlu0 %v265
        %v267 = vpop.xlane.xlu0 %266
        %v268 = vadd.f32 %v249, %v250
        %269 = vadd.xlane.f32.xlu0 %v268
        %v270 = vpop.xlane.xlu0 %269
        %v271 = vadd.f32 %v251, %v252
        %272 = vadd.xlane.f32.xlu0 %v271
        %v273 = vpop.xlane.xlu0 %272
        %v274 = vadd.f32 %v253, %v254
        %275 = vadd.xlane.f32.xlu0 %v274
        %v276 = vpop.xlane.xlu0 %275
        %v277 = vadd.f32 %v255, %v256
        %278 = vadd.xlane.f32.xlu0 %v277
        %v279 = vpop.xlane.xlu0 %278
        %v280 = vadd.f32 %v257, %v258
        %281 = vadd.xlane.f32.xlu0 %v280
        %v282 = vpop.xlane.xlu0 %281
        %v283 = vmul.f32 %v261, 0.00390625
        %v284 = vmul.f32 %v264, 0.00390625
        %v285 = vmul.f32 %v267, 0.00390625
        %v286 = vmul.f32 %v270, 0.00390625
        %v287 = vmul.f32 %v273, 0.00390625
        %v288 = vmul.f32 %v276, 0.00390625
        %v289 = vmul.f32 %v279, 0.00390625
        %v290 = vmul.f32 %v282, 0.00390625
        %v291 = vld [vmem:[%s1] sm:$0xff]
        %v292 = vld [vmem:[%s1 + $0x8] sm:$0xff]
        %v293 = vld [vmem:[%s1 + $0x10] sm:$0xff]
        %v294 = vld [vmem:[%s1 + $0x18] sm:$0xff]
        %v295 = vld [vmem:[%s1 + $0x20] sm:$0xff]
        %v296 = vld [vmem:[%s1 + $0x28] sm:$0xff]
        %v297 = vld [vmem:[%s1 + $0x30] sm:$0xff]
        %v298 = vld [vmem:[%s1 + $0x38] sm:$0xff]
        %v299 = vmul.f32 %v291, %v283
        %v300 = vmul.f32 %v292, %v284
        %v301 = vmul.f32 %v293, %v285
        %v302 = vmul.f32 %v294, %v286
        %v303 = vmul.f32 %v295, %v287
        %v304 = vmul.f32 %v296, %v288
        %v305 = vmul.f32 %v297, %v289
        %v306 = vmul.f32 %v298, %v290
        %vm307 = vcmask 31744
        %v308 = vsel %vm307, %v299, 0.0
        %v309 = vsel %vm307, %v300, 0.0
        %v310 = vadd.f32 %v308, %v309
        %v311 = vsel %vm307, %v301, 0.0
        %v312 = vadd.f32 %v310, %v311
        %v313 = vsel %vm307, %v302, 0.0
        %v314 = vadd.f32 %v312, %v313
        %v315 = vsel %vm307, %v303, 0.0
        %v316 = vadd.f32 %v314, %v315
        %v317 = vsel %vm307, %v304, 0.0
        %v318 = vadd.f32 %v316, %v317
        %v319 = vsel %vm307, %v305, 0.0
        %v320 = vadd.f32 %v318, %v319
        %v321 = vsel %vm307, %v306, 0.0
        %v322 = vadd.f32 %v320, %v321
        %v323 = vrot.slane %v322, 4
        %v324 = vadd.f32 %v322, %v323
        %v325 = vrot.slane %v324, 2
        %v326 = vadd.f32 %v324, %v325
        %v327 = vrot.slane %v326, 1
        %v328 = vadd.f32 %v326, %v327
        %v329 = vld [vmem:[%s2] sm:$0x1]
        %v330 = vadd.f32 %v328, %v329
        %v331 = vmax.f32 %v330, 0.0
        %v332 = vld [vmem:[%s3] sm:$0xff]
        %v333 = vld [vmem:[%s3 + $0x8] sm:$0xff]
        %v334 = vld [vmem:[%s3 + $0x10] sm:$0xff]
        %v335 = vld [vmem:[%s3 + $0x18] sm:$0xff]
        %v336 = vld [vmem:[%s3 + $0x20] sm:$0xff]
        %v337 = vld [vmem:[%s3 + $0x28] sm:$0xff]
        %v338 = vld [vmem:[%s3 + $0x30] sm:$0xff]
        %v339 = vld [vmem:[%s3 + $0x38] sm:$0xff]
        %v340 = vlaneseq
        %v341 = vshrl.u32 %v340, 7
        %v342 = vsub.s32 0, %v341
        %v343 = vrot.slane %v331, %v342
        %v344 = vmul.f32 %v332, %v343
        %v345 = vmul.f32 %v333, %v343
        %v346 = vmul.f32 %v334, %v343
        %v347 = vmul.f32 %v335, %v343
        %v348 = vmul.f32 %v336, %v343
        %v349 = vmul.f32 %v337, %v343
        %v350 = vmul.f32 %v338, %v343
        %v351 = vmul.f32 %v339, %v343
        %v352 = vsel %vm307, %v344, 0.0
        %353 = vadd.xlane.f32.xlu0 %v352
        %v354 = vpop.xlane.xlu0 %353
        %v355 = vsel %vm307, %v345, 0.0
        %356 = vadd.xlane.f32.xlu0 %v355
        %v357 = vpop.xlane.xlu0 %356
        %v358 = vsel %vm307, %v346, 0.0
        %359 = vadd.xlane.f32.xlu0 %v358
        %v360 = vpop.xlane.xlu0 %359
        %v361 = vsel %vm307, %v347, 0.0
        %362 = vadd.xlane.f32.xlu0 %v361
        %v363 = vpop.xlane.xlu0 %362
        %v364 = vsel %vm307, %v348, 0.0
        %365 = vadd.xlane.f32.xlu0 %v364
        %v366 = vpop.xlane.xlu0 %365
        %v367 = vsel %vm307, %v349, 0.0
        %368 = vadd.xlane.f32.xlu0 %v367
        %v369 = vpop.xlane.xlu0 %368
        %v370 = vsel %vm307, %v350, 0.0
        %371 = vadd.xlane.f32.xlu0 %v370
        %v372 = vpop.xlane.xlu0 %371
        %v373 = vsel %vm307, %v351, 0.0
        %374 = vadd.xlane.f32.xlu0 %v373
        %v375 = vpop.xlane.xlu0 %374
        %v376 = vld [vmem:[%s4] sm:$0xff]
        %v377 = vld [vmem:[%s4 + $0x8] sm:$0xff]
        %v378 = vld [vmem:[%s4 + $0x10] sm:$0xff]
        %v379 = vld [vmem:[%s4 + $0x18] sm:$0xff]
        %v380 = vld [vmem:[%s4 + $0x20] sm:$0xff]
        %v381 = vld [vmem:[%s4 + $0x28] sm:$0xff]
        %v382 = vld [vmem:[%s4 + $0x30] sm:$0xff]
        %v383 = vld [vmem:[%s4 + $0x38] sm:$0xff]
        %v384 = vadd.f32 %v354, %v376
        %v385 = vadd.f32 %v357, %v377
        %v386 = vadd.f32 %v360, %v378
        %v387 = vadd.f32 %v363, %v379
        %v388 = vadd.f32 %v366, %v380
        %v389 = vadd.f32 %v369, %v381
        %v390 = vadd.f32 %v372, %v382
        %v391 = vadd.f32 %v375, %v383
        %v392 = vxor.u32 %v384, 2147483648
        %v393 = vxor.u32 %v385, 2147483648
        %v394 = vxor.u32 %v386, 2147483648
        %v395 = vxor.u32 %v387, 2147483648
        %v396 = vxor.u32 %v388, 2147483648
        %v397 = vxor.u32 %v389, 2147483648
        %v398 = vxor.u32 %v390, 2147483648
        %v399 = vxor.u32 %v391, 2147483648
        %v400 = vmul.f32 %v392, 1.442695
        %v401 = vpow.pop %v400
        %v402 = vmul.f32 %v393, 1.442695
        %v403 = vpow.pop %v402
        %v404 = vmul.f32 %v394, 1.442695
        %v405 = vpow.pop %v404
        %v406 = vmul.f32 %v395, 1.442695
        %v407 = vpow.pop %v406
        %v408 = vmul.f32 %v396, 1.442695
        %v409 = vpow.pop %v408
        %v410 = vmul.f32 %v397, 1.442695
        %v411 = vpow.pop %v410
        %v412 = vmul.f32 %v398, 1.442695
        %v413 = vpow.pop %v412
        %v414 = vmul.f32 %v399, 1.442695
        %v415 = vpow.pop %v414
        %v416 = vadd.f32 %v401, 1.0
        %v417 = vadd.f32 %v403, 1.0
        %v418 = vadd.f32 %v405, 1.0
        %v419 = vadd.f32 %v407, 1.0
        %v420 = vadd.f32 %v409, 1.0
        %v421 = vadd.f32 %v411, 1.0
        %v422 = vadd.f32 %v413, 1.0
        %v423 = vadd.f32 %v415, 1.0
        %v424 = vrcp.pop %v416
        %v425 = vmul.f32 1.0, %v424
        %v426 = vrcp.pop %v417
        %v427 = vmul.f32 1.0, %v426
        %v428 = vrcp.pop %v418
        %v429 = vmul.f32 1.0, %v428
        %v430 = vrcp.pop %v419
        %v431 = vmul.f32 1.0, %v430
        %v432 = vrcp.pop %v420
        %v433 = vmul.f32 1.0, %v432
        %v434 = vrcp.pop %v421
        %v435 = vmul.f32 1.0, %v434
        %v436 = vrcp.pop %v422
        %v437 = vmul.f32 1.0, %v436
        %v438 = vrcp.pop %v423
        %v439 = vmul.f32 1.0, %v438
        %441 = vset.pattern.permute.xlu0 0
        %442 = vperm.xlu0 %441, %v425
        %v443 = vpop.permute.xlu0 %442
        %446 = vset.pattern.permute.xlu0 0
        %447 = vperm.xlu0 %446, %v427
        %v448 = vpop.permute.xlu0 %447
        %451 = vset.pattern.permute.xlu0 0
        %452 = vperm.xlu0 %451, %v429
        %v453 = vpop.permute.xlu0 %452
        %456 = vset.pattern.permute.xlu0 0
        %457 = vperm.xlu0 %456, %v431
        %v458 = vpop.permute.xlu0 %457
        %461 = vset.pattern.permute.xlu0 0
        %462 = vperm.xlu0 %461, %v433
        %v463 = vpop.permute.xlu0 %462
        %466 = vset.pattern.permute.xlu0 0
        %467 = vperm.xlu0 %466, %v435
        %v468 = vpop.permute.xlu0 %467
        %471 = vset.pattern.permute.xlu0 0
        %472 = vperm.xlu0 %471, %v437
        %v473 = vpop.permute.xlu0 %472
        %476 = vset.pattern.permute.xlu0 0
        %477 = vperm.xlu0 %476, %v439
        %v478 = vpop.permute.xlu0 %477
        %v480 = vmul.f32 %v243, %v443
        %v481 = vmul.f32 %v244, %v443
        %v482 = vmul.f32 %v245, %v448
        %v483 = vmul.f32 %v246, %v448
        %v484 = vmul.f32 %v247, %v453
        %v485 = vmul.f32 %v248, %v453
        %v486 = vmul.f32 %v249, %v458
        %v487 = vmul.f32 %v250, %v458
        %v488 = vmul.f32 %v251, %v463
        %v489 = vmul.f32 %v252, %v463
        %v490 = vmul.f32 %v253, %v468
        %v491 = vmul.f32 %v254, %v468
        %v492 = vmul.f32 %v255, %v473
        %v493 = vmul.f32 %v256, %v473
        %v494 = vmul.f32 %v257, %v478
        %v495 = vmul.f32 %v258, %v478
        %496 = vst [vmem:[%s242] sm:$0xff] %v480
        %497 = vst [vmem:[%s242 + $0x8] sm:$0xff] %v481
        %498 = vst [vmem:[%s242 + $0x10] sm:$0xff] %v482
        %499 = vst [vmem:[%s242 + $0x18] sm:$0xff] %v483
        %500 = vst [vmem:[%s242 + $0x20] sm:$0xff] %v484
        %501 = vst [vmem:[%s242 + $0x28] sm:$0xff] %v485
        %502 = vst [vmem:[%s242 + $0x30] sm:$0xff] %v486
        %503 = vst [vmem:[%s242 + $0x38] sm:$0xff] %v487
        %504 = vst [vmem:[%s242 + $0x40] sm:$0xff] %v488
        %505 = vst [vmem:[%s242 + $0x48] sm:$0xff] %v489
        %506 = vst [vmem:[%s242 + $0x50] sm:$0xff] %v490
        %507 = vst [vmem:[%s242 + $0x58] sm:$0xff] %v491
        %508 = vst [vmem:[%s242 + $0x60] sm:$0xff] %v492
        %509 = vst [vmem:[%s242 + $0x68] sm:$0xff] %v493
        %510 = vst [vmem:[%s242 + $0x70] sm:$0xff] %v494
        %511 = vst [vmem:[%s242 + $0x78] sm:$0xff] %v495
        %s512 = sand.u32 %s140, 1
        %s513 = scalar_lea.sflag [#allocation4], %s512
        %s514 = sand.u32 %s140, 1
        %s515 = smul.addr %s514, 128
        %s516 = scalar_lea.vmem [#allocation5], %s515
        // Predicated region
        $region45: #{tpu_custom_call.1} parent=39 // pred_check
          %p517 = pneg %p150
        $region46: #{tpu_custom_call.1} parent=39 // pred_check_branch
          %519 = sbr.rel (%p517) target = $region48
        $region47: #{tpu_custom_call.1} parent=39 // pred_region
          %s521 = ssub.s32 2048, 2048
          %522 = vsyncadd %s513, %s521
          %s523 = smul.addr %s22, 16
          %s524 = smul.addr %s523, 128
          %s525 = scalar_lea.hbm %s5, %s524
          %s526 = sshll.u32 %s516, 4
          %s527 = int_to_ptr.vmem [resolvable:$true] %s526
          %532 = dma.vmem_to_hbm [thread:$0]  %s527, 2048, %s525, %s513, 256, 256, 16
        $region48: #{tpu_custom_call.1} parent=39 // pred_fallthru
          _
      $region40: #{tpu_custom_call.1} parent=5 // pred_fallthru
        _
      %p533 = scmp.le.s32.totalorder 2, %s17
      // Predicated region
      $region49: #{tpu_custom_call.1} parent=5 // pred_check
        %p534 = pneg %p533
      $region50: #{tpu_custom_call.1} parent=5 // pred_check_branch
        %536 = sbr.rel (%p534) target = $region52
      $region51: #{tpu_custom_call.1} parent=5 // pred_region
        %s537 = ssub.s32 %s17, 2
        // Predicated region
        $region53: #{tpu_custom_call.1} parent=51 // pred_check
          %p538 = pneg %p156
        $region54: #{tpu_custom_call.1} parent=51 // pred_check_branch
          %540 = sbr.rel (%p538) target = $region56
        $region55: #{tpu_custom_call.1} parent=51 // pred_region
          %s541 = sand.u32 %s141, 1
          %s542 = scalar_lea.sflag [#allocation4], %s541
          %s543 = sand.u32 %s141, 1
          %s544 = smul.addr %s543, 128
          %s545 = scalar_lea.vmem [#allocation5], %s544
          %546 = dma.done %s542, 2048
        $region56: #{tpu_custom_call.1} parent=51 // pred_fallthru
          _
      $region52: #{tpu_custom_call.1} parent=5 // pred_fallthru
        _
    $region6: #{tpu_custom_call.1} parent=1 // loop_footer
      %s21 = sadd.s32 1, %s17
    $region7: #{tpu_custom_call.1} parent=1 // loop_footer_branch
      %16 = sbr.rel target = $region3
    $region8: #{tpu_custom_call.1} parent=1 // loop_exit
      _
    %547 = vsyncpa [#allocation3], 1
    %s548 = scalar_lea.sflag [#allocation3], 1
    %549 = vsyncpa %s548, 1
    %550 = vsyncpa [#allocation4], 1
    %s551 = scalar_lea.sflag [#allocation4], 1
    %552 = vsyncpa %s551, 1

</llo_original>
